<compile_context>
chip_gen: v7x
topology: tpu7x:2x2x1
jax: 0.10.0
libtpu: 0.0.40
codegen_flags: <defaults>
</compile_context>

<pallas_src>
import math
from functools import partial

import jax
import jax.numpy as jnp
from jax import lax
from jax.experimental import pallas as pl
from jax.experimental.pallas import tpu as pltpu


def _attn_head_kernel(x_ref, w_ref, b_ref, mask_ref,
                      ctx_ref, k_ref, v_ref, *maybe_probs_ref,
                      head_dim):
    """One (batch, head) grid step.

    x_ref:    (1, S, H)      hidden states for this batch element
    w_ref:    (1, H, 3d)     per-head [Wq_scaled | Wk | Wv] (MXU [in, out])
    b_ref:    (1, 1, 3d)     per-head [bq_scaled | bk | bv]
    mask_ref: (1, Sm, S)     additive mask, Sm in {1, S}
    ctx_ref:  (1, 1, S, d)   per-head context
    k_ref:    (1, 1, S, d)   present_key_value[0] slice
    v_ref:    (1, 1, S, d)   present_key_value[1] slice
    probs_ref (optional): (1, 1, S, S) attention probabilities
    """
    d = head_dim
    cdt = x_ref.dtype                          # MXU compute dtype (no upcast)

    x = x_ref[0]                               # (S, H)
    w = w_ref[0]                               # (H, 3d)
    bias = b_ref[0].astype(jnp.float32)        # (1, 3d)
    mask = mask_ref[0].astype(jnp.float32)     # (Sm, S)

    # Fused per-head Q/K/V projection: full-H contraction, f32 accumulation.
    qkv = jnp.dot(x, w, preferred_element_type=jnp.float32) + bias   # (S, 3d)

    q_f32 = qkv[:, 0 * d:1 * d]                # already scaled by 1/sqrt(d)
    k_f32 = qkv[:, 1 * d:2 * d]
    v_f32 = qkv[:, 2 * d:3 * d]

    # scores = Q K^T + mask (contract head_dim of both) -> (S, S), f32
    scores = lax.dot_general(
        q_f32.astype(cdt), k_f32.astype(cdt),
        dimension_numbers=(((1,), (1,)), ((), ())),
        preferred_element_type=jnp.float32) + mask

    # Numerically-stable softmax with deferred normalization.
    m = jnp.max(scores, axis=-1, keepdims=True)
    e = jnp.exp(scores - m)                                   # (S, S) f32
    denom = jnp.sum(e, axis=-1, keepdims=True)                # (S, 1)
    r = pl.reciprocal(denom)                                  # EUP slot, exact

    # ctx = softmax(scores) @ V, but normalize the (S, d) result instead of
    # the (S, S) probabilities.
    ctx = jnp.dot(e.astype(cdt), v_f32.astype(cdt),
                  preferred_element_type=jnp.float32) * r     # (S, d) f32

    ctx_ref[0, 0] = ctx.astype(ctx_ref.dtype)
    k_ref[0, 0] = k_f32.astype(k_ref.dtype)
    v_ref[0, 0] = v_f32.astype(v_ref.dtype)

    if maybe_probs_ref:                        # static Python check
        probs_ref, = maybe_probs_ref
        probs_ref[0, 0] = (e * r).astype(probs_ref.dtype)


def vae_decoder_roberta_self_attention(hidden_states, wq, bq, wk, bk, wv, bv,
                                       attention_mask=None, *, num_heads,
                                       output_attentions=False,
                                       compute_dtype=None,
                                       probs_dtype=None):
    """Default forward path of VaeDecoderRobertaSelfAttention.

    hidden_states: [B, S, H]
    wq/wk/wv:      [H, H] in PyTorch nn.Linear layout [out_features, in_features]
    bq/bk/bv:      [H]
    attention_mask: additive mask, shape [B, S], [B, 1, 1, S] (HF extended) or
                    [B, 1, S, S] (e.g. causal); broadcast over heads. Or None.
    compute_dtype: optional cast (e.g. jnp.bfloat16) for MXU-native matmuls;
                    accumulation stays f32.
    """
    B, S, H = hidden_states.shape
    assert H % num_heads == 0
    nH = num_heads
    d = H // nH
    scale = 1.0 / math.sqrt(d)

    x = hidden_states if compute_dtype is None else hidden_states.astype(compute_dtype)
    cdt = x.dtype

    # One-time wrapper-side re-layout to per-head-contiguous MXU-native weights:
    # wqkv[h] = [Wq_h * scale | Wk_h | Wv_h], shape (H, 3d).
    def per_head(w):                                # torch [out, in] -> (nH, H, d)
        return jnp.transpose(w.astype(cdt).reshape(nH, d, H), (0, 2, 1))

    wqkv = jnp.concatenate(
        [per_head(wq) * scale, per_head(wk), per_head(wv)], axis=-1)   # (nH, H, 3d)
    bqkv = jnp.concatenate(
        [(bq * scale).reshape(nH, 1, d),
         bk.reshape(nH, 1, d),
         bv.reshape(nH, 1, d)], axis=-1).astype(jnp.float32)           # (nH, 1, 3d)

    # Normalize the additive attention mask to (B, Sm, S), Sm in {1, S}.
    if attention_mask is None:
        mask = jnp.zeros((B, 1, S), dtype=jnp.float32)
    else:
        am = attention_mask
        if am.ndim == 2:                   # (B, S)
            am = am[:, None, :]
        elif am.ndim == 4:                 # (B, 1, Sq, S)
            if am.shape[1] != 1:
                raise NotImplementedError("per-head attention masks not supported")
            am = am[:, 0]
        elif am.ndim != 3:
            raise ValueError(f"unsupported attention_mask rank {am.ndim}")
        if am.shape[0] != B or am.shape[-1] != S or am.shape[1] not in (1, S):
            raise ValueError(f"unsupported attention_mask shape {attention_mask.shape}")
        mask = am.astype(jnp.float32)
    Sm = mask.shape[1]

    kernel = partial(_attn_head_kernel, head_dim=d)

    out_shape = [
        jax.ShapeDtypeStruct((B, nH, S, d), cdt),   # per-head context
        jax.ShapeDtypeStruct((B, nH, S, d), cdt),   # key_layer
        jax.ShapeDtypeStruct((B, nH, S, d), cdt),   # value_layer
    ]
    out_specs = [
        pl.BlockSpec((1, 1, S, d), lambda b, h: (b, h, 0, 0)),
        pl.BlockSpec((1, 1, S, d), lambda b, h: (b, h, 0, 0)),
        pl.BlockSpec((1, 1, S, d), lambda b, h: (b, h, 0, 0)),
    ]
    probs_bytes = 0
    if output_attentions:
        p_dt = cdt if probs_dtype is None else probs_dtype
        out_shape.append(jax.ShapeDtypeStruct((B, nH, S, S), p_dt))
        out_specs.append(pl.BlockSpec((1, 1, S, S), lambda b, h: (b, h, 0, 0)))
        probs_bytes = B * nH * S * S * jnp.dtype(p_dt).itemsize

    itemsize = jnp.dtype(cdt).itemsize
    cost = pl.CostEstimate(
        flops=2 * B * S * H * 3 * H + 2 * 2 * B * nH * S * S * d,
        transcendentals=B * nH * S * (S + 1),
        bytes_accessed=(B * S * H * itemsize                 # x (read ~once/batch)
                        + B * nH * H * 3 * d * itemsize      # weights per batch
                        + 3 * B * S * H * itemsize           # ctx + k + v out
                        + B * Sm * S * 4                     # mask
                        + probs_bytes),
    )

    outs = pl.pallas_call(
        kernel,
        out_shape=tuple(out_shape),
        grid_spec=pl.GridSpec(
            grid=(B, nH),
            in_specs=[
                pl.BlockSpec((1, S, H), lambda b, h: (b, 0, 0)),        # x
                pl.BlockSpec((1, H, 3 * d), lambda b, h: (h, 0, 0)),    # wqkv
                pl.BlockSpec((1, 1, 3 * d), lambda b, h: (h, 0, 0)),    # bqkv
                pl.BlockSpec((1, Sm, S), lambda b, h: (b, 0, 0)),       # mask
            ],
            out_specs=tuple(out_specs),
        ),
        compiler_params=pltpu.CompilerParams(
            dimension_semantics=("parallel", "parallel"),
        ),
        cost_estimate=cost,
    )(x, wqkv, bqkv, mask)

    if output_attentions:
        ctx_heads, k_layer, v_layer, probs = outs
    else:
        ctx_heads, k_layer, v_layer = outs
        probs = None

    # Merge heads (same permute+view the PyTorch module performs).
    context_layer = jnp.transpose(ctx_heads, (0, 2, 1, 3)).reshape(B, S, H)

    return {
        "context_layer": context_layer,
        "attention_probs": probs,
        "present_key_value": (k_layer, v_layer),
    }


if __name__ == "__main__":
    # Small shapes consistent with the module: batch=2, seq=8, hidden=32, heads=2.
    B, S, H, NH = 2, 8, 32, 2
    d = H // NH
    key = jax.random.PRNGKey(0)
    ks = jax.random.split(key, 8)

    hidden_states = jax.random.normal(ks[0], (B, S, H), dtype=jnp.float32)
    wq = jax.random.normal(ks[1], (H, H), dtype=jnp.float32) * 0.05
    bq = jax.random.normal(ks[2], (H,), dtype=jnp.float32) * 0.05
    wk = jax.random.normal(ks[3], (H, H), dtype=jnp.float32) * 0.05
    bk = jax.random.normal(ks[4], (H,), dtype=jnp.float32) * 0.05
    wv = jax.random.normal(ks[5], (H, H), dtype=jnp.float32) * 0.05
    bv = jax.random.normal(ks[6], (H,), dtype=jnp.float32) * 0.05
    # HuggingFace-style extended additive mask [B, 1, 1, S]: 0 keep, -10000 masked.
    keep = (jax.random.uniform(ks[7], (B, S)) > 0.2).astype(jnp.float32)
    attention_mask = ((1.0 - keep) * -10000.0).reshape(B, 1, 1, S)

    # Pure-JAX reference (same math as the PyTorch forward, eval mode).
    q = hidden_states @ wq.T + bq
    k = hidden_states @ wk.T + bk
    v = hidden_states @ wv.T + bv

    def heads(t):
        return t.reshape(B, S, NH, d).transpose(0, 2, 1, 3)

    qh, kh, vh = heads(q), heads(k), heads(v)
    ref_scores = jnp.einsum("bhqd,bhkd->bhqk", qh, kh) / math.sqrt(d)
    ref_scores = ref_scores + attention_mask            # [B,1,1,S] broadcasts
    ref_probs = jax.nn.softmax(ref_scores, axis=-1)
    ref_ctx = jnp.einsum("bhqk,bhkd->bhqd", ref_probs, vh)
    ref_ctx = ref_ctx.transpose(0, 2, 1, 3).reshape(B, S, H)

    # 1) Default fast path: no attention_probs materialization.
    out = vae_decoder_roberta_self_attention(
        hidden_states, wq, bq, wk, bk, wv, bv, attention_mask, num_heads=NH)
    ctx = jax.block_until_ready(out["context_layer"])
    k_layer, v_layer = out["present_key_value"]
    assert out["attention_probs"] is None
    assert ctx.shape == (B, S, H)
    assert jnp.allclose(ctx, ref_ctx, atol=1e-5, rtol=1e-5)
    assert jnp.allclose(k_layer, kh, atol=1e-5, rtol=1e-5)
    assert jnp.allclose(v_layer, vh, atol=1e-5, rtol=1e-5)

    # 2) output_attentions=True path: probs are emitted and checked too.
    out_a = vae_decoder_roberta_self_attention(
        hidden_states, wq, bq, wk, bk, wv, bv, attention_mask, num_heads=NH,
        output_attentions=True)
    ctx_a = jax.block_until_ready(out_a["context_layer"])
    probs_a = out_a["attention_probs"]
    assert probs_a.shape == (B, NH, S, S)
    assert jnp.allclose(ctx_a, ref_ctx, atol=1e-5, rtol=1e-5)
    assert jnp.allclose(probs_a, ref_probs, atol=1e-5, rtol=1e-5)

    # 3) bf16 MXU smoke test (f32 accumulation) — loose tolerance vs f32 ref.
    out_bf = vae_decoder_roberta_self_attention(
        hidden_states, wq, bq, wk, bk, wv, bv, attention_mask, num_heads=NH,
        compute_dtype=jnp.bfloat16)
    ctx_bf = jax.block_until_ready(out_bf["context_layer"]).astype(jnp.float32)
    assert jnp.all(jnp.isfinite(ctx_bf))
    assert jnp.allclose(ctx_bf, ref_ctx, atol=5e-2, rtol=5e-2)

    print("KERNEL_OK")
</pallas_src>

<mosaic_0001>
module attributes {stable_mosaic.version = 11 : i64} {
  func.func @_attn_head_kernel(%arg0: i32, %arg1: i32, %arg2: memref<1x8x32xf32, #tpu.memory_space<vmem>>, %arg3: memref<1x32x48xf32, #tpu.memory_space<vmem>>, %arg4: memref<1x1x48xf32, #tpu.memory_space<vmem>>, %arg5: memref<1x1x8xf32, #tpu.memory_space<vmem>>, %arg6: memref<1x1x8x16xf32, #tpu.memory_space<vmem>>, %arg7: memref<1x1x8x16xf32, #tpu.memory_space<vmem>>, %arg8: memref<1x1x8x16xf32, #tpu.memory_space<vmem>>) attributes {dimension_semantics = [#tpu.dimension_semantics<parallel>, #tpu.dimension_semantics<parallel>], iteration_bounds = array<i64: 2, 2>, scalar_prefetch = 0 : i64, scratch_operands = 0 : i64, tpu.core_type = #tpu.core_type<tc>, window_params = [{transform_indices = @transform_0, window_bounds = array<i64: 1, 8, 32>}, {transform_indices = @transform_1, window_bounds = array<i64: 1, 32, 48>}, {transform_indices = @transform_2, window_bounds = array<i64: 1, 1, 48>}, {transform_indices = @transform_3, window_bounds = array<i64: 1, 1, 8>}, {transform_indices = @transform_4, window_bounds = array<i64: 1, 1, 8, 16>}, {transform_indices = @transform_5, window_bounds = array<i64: 1, 1, 8, 16>}, {transform_indices = @transform_6, window_bounds = array<i64: 1, 1, 8, 16>}]} {
    %c0 = arith.constant 0 : index
    %c0_0 = arith.constant 0 : index
    %c0_1 = arith.constant 0 : index
    %0 = vector.load %arg2[%c0, %c0_0, %c0_1] : memref<1x8x32xf32, #tpu.memory_space<vmem>>, vector<1x8x32xf32>
    %1 = vector.shape_cast %0 : vector<1x8x32xf32> to vector<8x32xf32>
    %c0_2 = arith.constant 0 : index
    %c0_3 = arith.constant 0 : index
    %c0_4 = arith.constant 0 : index
    %2 = vector.load %arg3[%c0_2, %c0_3, %c0_4] : memref<1x32x48xf32, #tpu.memory_space<vmem>>, vector<1x32x48xf32>
    %3 = vector.shape_cast %2 : vector<1x32x48xf32> to vector<32x48xf32>
    %c0_5 = arith.constant 0 : index
    %c0_6 = arith.constant 0 : index
    %c0_7 = arith.constant 0 : index
    %4 = vector.load %arg4[%c0_5, %c0_6, %c0_7] : memref<1x1x48xf32, #tpu.memory_space<vmem>>, vector<1x1x48xf32>
    %5 = vector.shape_cast %4 : vector<1x1x48xf32> to vector<1x48xf32>
    %c0_8 = arith.constant 0 : index
    %c0_9 = arith.constant 0 : index
    %c0_10 = arith.constant 0 : index
    %6 = vector.load %arg5[%c0_8, %c0_9, %c0_10] : memref<1x1x8xf32, #tpu.memory_space<vmem>>, vector<1x1x8xf32>
    %7 = vector.shape_cast %6 : vector<1x1x8xf32> to vector<1x8xf32>
    %cst = arith.constant dense<0.000000e+00> : vector<8x48xf32>
    %8 = tpu.matmul %1, %3, %cst {dimension_numbers = #tpu.dot_dimension_numbers<[1], [0], [0], [1], [0, 0, 1, 1], [], []>} : vector<8x32xf32>, vector<32x48xf32>, vector<8x48xf32> -> vector<8x48xf32>
    %9 = vector.broadcast %5 : vector<1x48xf32> to vector<8x48xf32>
    %10 = arith.addf %8, %9 : vector<8x48xf32>
    %11 = vector.extract_strided_slice %10 {offsets = [0, 0], sizes = [8, 16], strides = [1, 1]} : vector<8x48xf32> to vector<8x16xf32>
    %12 = vector.extract_strided_slice %10 {offsets = [0, 16], sizes = [8, 16], strides = [1, 1]} : vector<8x48xf32> to vector<8x16xf32>
    %13 = vector.extract_strided_slice %10 {offsets = [0, 32], sizes = [8, 16], strides = [1, 1]} : vector<8x48xf32> to vector<8x16xf32>
    %cst_11 = arith.constant dense<0.000000e+00> : vector<8x8xf32>
    %14 = tpu.matmul %11, %12, %cst_11 {dimension_numbers = #tpu.dot_dimension_numbers<[1], [1], [0], [0], [0, 0, 1, 0], [], []>} : vector<8x16xf32>, vector<8x16xf32>, vector<8x8xf32> -> vector<8x8xf32>
    %15 = vector.broadcast %7 : vector<1x8xf32> to vector<8x8xf32>
    %16 = arith.addf %14, %15 : vector<8x8xf32>
    %cst_12 = arith.constant dense<0xFF800000> : vector<8xf32>
    %17 = vector.multi_reduction <maximumf>, %16, %cst_12 [1] : vector<8x8xf32> to vector<8xf32>
    %18 = vector.shape_cast %17 : vector<8xf32> to vector<8x1xf32>
    %19 = vector.broadcast %18 : vector<8x1xf32> to vector<8x8xf32>
    %20 = arith.subf %16, %19 : vector<8x8xf32>
    %21 = math.exp %20 : vector<8x8xf32>
    %cst_13 = arith.constant dense<0.000000e+00> : vector<8xf32>
    %22 = vector.multi_reduction <add>, %21, %cst_13 [1] : vector<8x8xf32> to vector<8xf32>
    %23 = vector.shape_cast %22 : vector<8xf32> to vector<8x1xf32>
    %24 = tpu.reciprocal %23 : vector<8x1xf32> -> vector<8x1xf32>
    %cst_14 = arith.constant dense<0.000000e+00> : vector<8x16xf32>
    %25 = tpu.matmul %21, %13, %cst_14 {dimension_numbers = #tpu.dot_dimension_numbers<[1], [0], [0], [1], [0, 0, 1, 1], [], []>} : vector<8x8xf32>, vector<8x16xf32>, vector<8x16xf32> -> vector<8x16xf32>
    %26 = vector.broadcast %24 : vector<8x1xf32> to vector<8x16xf32>
    %27 = arith.mulf %25, %26 : vector<8x16xf32>
    %c0_15 = arith.constant 0 : index
    %c0_16 = arith.constant 0 : index
    %c0_17 = arith.constant 0 : index
    %c0_18 = arith.constant 0 : index
    %28 = vector.load %arg6[%c0_15, %c0_16, %c0_17, %c0_18] : memref<1x1x8x16xf32, #tpu.memory_space<vmem>>, vector<1x1x8x16xf32>
    %29 = vector.shape_cast %28 : vector<1x1x8x16xf32> to vector<8x16xf32>
    %30 = vector.shape_cast %27 : vector<8x16xf32> to vector<1x1x8x16xf32>
    tpu.vector_store %arg6[%c0_15, %c0_16, %c0_17, %c0_18], %30 {strides = array<i32>} : memref<1x1x8x16xf32, #tpu.memory_space<vmem>>, vector<1x1x8x16xf32>,
    %c0_19 = arith.constant 0 : index
    %c0_20 = arith.constant 0 : index
    %c0_21 = arith.constant 0 : index
    %c0_22 = arith.constant 0 : index
    %31 = vector.load %arg7[%c0_19, %c0_20, %c0_21, %c0_22] : memref<1x1x8x16xf32, #tpu.memory_space<vmem>>, vector<1x1x8x16xf32>
    %32 = vector.shape_cast %31 : vector<1x1x8x16xf32> to vector<8x16xf32>
    %33 = vector.shape_cast %12 : vector<8x16xf32> to vector<1x1x8x16xf32>
    tpu.vector_store %arg7[%c0_19, %c0_20, %c0_21, %c0_22], %33 {strides = array<i32>} : memref<1x1x8x16xf32, #tpu.memory_space<vmem>>, vector<1x1x8x16xf32>,
    %c0_23 = arith.constant 0 : index
    %c0_24 = arith.constant 0 : index
    %c0_25 = arith.constant 0 : index
    %c0_26 = arith.constant 0 : index
    %34 = vector.load %arg8[%c0_23, %c0_24, %c0_25, %c0_26] : memref<1x1x8x16xf32, #tpu.memory_space<vmem>>, vector<1x1x8x16xf32>
    %35 = vector.shape_cast %34 : vector<1x1x8x16xf32> to vector<8x16xf32>
    %36 = vector.shape_cast %13 : vector<8x16xf32> to vector<1x1x8x16xf32>
    tpu.vector_store %arg8[%c0_23, %c0_24, %c0_25, %c0_26], %36 {strides = array<i32>} : memref<1x1x8x16xf32, #tpu.memory_space<vmem>>, vector<1x1x8x16xf32>,
    return
  }
  func.func @transform_0(%arg0: i32, %arg1: i32) -> (i32, i32, i32) {
    %c0_i32 = arith.constant 0 : i32
    %c0_i32_0 = arith.constant 0 : i32
    %c0_i32_1 = arith.constant 0 : i32
    return %arg0, %c0_i32, %c0_i32_0 : i32, i32, i32
  }
  func.func @transform_1(%arg0: i32, %arg1: i32) -> (i32, i32, i32) {
    %c0_i32 = arith.constant 0 : i32
    %c0_i32_0 = arith.constant 0 : i32
    %c0_i32_1 = arith.constant 0 : i32
    return %arg1, %c0_i32, %c0_i32_0 : i32, i32, i32
  }
  func.func @transform_2(%arg0: i32, %arg1: i32) -> (i32, i32, i32) {
    %c0_i32 = arith.constant 0 : i32
    %c0_i32_0 = arith.constant 0 : i32
    %c0_i32_1 = arith.constant 0 : i32
    return %arg1, %c0_i32, %c0_i32_0 : i32, i32, i32
  }
  func.func @transform_3(%arg0: i32, %arg1: i32) -> (i32, i32, i32) {
    %c0_i32 = arith.constant 0 : i32
    %c0_i32_0 = arith.constant 0 : i32
    %c0_i32_1 = arith.constant 0 : i32
    return %arg0, %c0_i32, %c0_i32_0 : i32, i32, i32
  }
  func.func @transform_4(%arg0: i32, %arg1: i32) -> (i32, i32, i32, i32) {
    %c0_i32 = arith.constant 0 : i32
    %c0_i32_0 = arith.constant 0 : i32
    %c0_i32_1 = arith.constant 0 : i32
    return %arg0, %arg1, %c0_i32, %c0_i32_0 : i32, i32, i32, i32
  }
  func.func @transform_5(%arg0: i32, %arg1: i32) -> (i32, i32, i32, i32) {
    %c0_i32 = arith.constant 0 : i32
    %c0_i32_0 = arith.constant 0 : i32
    %c0_i32_1 = arith.constant 0 : i32
    return %arg0, %arg1, %c0_i32, %c0_i32_0 : i32, i32, i32, i32
  }
  func.func @transform_6(%arg0: i32, %arg1: i32) -> (i32, i32, i32, i32) {
    %c0_i32 = arith.constant 0 : i32
    %c0_i32_0 = arith.constant 0 : i32
    %c0_i32_1 = arith.constant 0 : i32
    return %arg0, %arg1, %c0_i32, %c0_i32_0 : i32, i32, i32, i32
  }
}

</mosaic_0001>

<llo_original>
// kernel: tpu_custom_call.1
$region0: #{tpu_custom_call.1}
  #allocation0 [shape = 'u32[]', space=smem, size = 0x4, offset = 0x4, fixed_abs, tag = 'smem constant byte address 0x4 - core index']
  #allocation1 [shape = 'u32[144,128]{1,0:T(1,128)}', space=vmem, size = 0x12000, scoped, tag = 'internal scratch']
  %s0 = inlined_call_operand.hbm [shape: f32[2,8,32], index: 0, kind: input, shape index: {}]
  %s1 = inlined_call_operand.hbm [shape: f32[2,32,48], index: 1, kind: input, shape index: {}]
  %s2 = inlined_call_operand.vmem [shape: f32[2,1,48], index: 2, kind: input, shape index: {}]
  %s3 = inlined_call_operand.vmem [shape: f32[2,1,8], index: 3, kind: input, shape index: {}]
  %s4 = inlined_call_operand.hbm [shape: f32[2,2,8,16], index: 4, kind: output, shape index: {0}]
  %s5 = inlined_call_operand.hbm [shape: f32[2,2,8,16], index: 5, kind: output, shape index: {1}]
  %s6 = inlined_call_operand.hbm [shape: f32[2,2,8,16], index: 6, kind: output, shape index: {2}]
  %7 = xla_tuple %s4, %s5, %s6
  %s8 = sld [smem:[#allocation0]]
  $region73: #{tpu_custom_call.1} parent=0
    _
  %s10 = ssub.s32 1, %s8
  %s11 = scalar_select 0, %s10, %s8
  $region1: #{tpu_custom_call.1} parent=0
    #allocation2 [shape = 'u8[8192]{0}', space=vmem, size = 0x2000, scoped, tag = 'input window, operand 0']
    #allocation3 [shape = 's32[2]{0}', space=sflag, size = 0x8, scoped, tag = 'scoped memory for tpu_custom_call.1']
    #allocation4 [shape = 's32[2]{0}', space=sflag, size = 0x8, scoped, tag = 'scoped memory for tpu_custom_call.1']
    #allocation5 [shape = 'u8[32768]{0}', space=vmem, size = 0x8000, scoped, tag = 'input window, operand 1']
    #allocation6 [shape = 's32[2]{0}', space=sflag, size = 0x8, scoped, tag = 'scoped memory for tpu_custom_call.1']
    #allocation7 [shape = 'u8[8192]{0}', space=vmem, size = 0x2000, scoped, tag = 'output window, operand 0']
    #allocation8 [shape = 'u8[8192]{0}', space=vmem, size = 0x2000, scoped, tag = 'output window, operand 1']
    #allocation9 [shape = 's32[2]{0}', space=sflag, size = 0x8, scoped, tag = 'scoped memory for tpu_custom_call.1']
    #allocation10 [shape = 'u8[8192]{0}', space=vmem, size = 0x2000, scoped, tag = 'output window, operand 2']
    %12 = vsyncpa [#allocation3], 0
    %s13 = scalar_lea.sflag [#allocation3], 1
    %14 = vsyncpa %s13, 0
    %15 = vsyncpa [#allocation6], 0
    %s16 = scalar_lea.sflag [#allocation6], 1
    %17 = vsyncpa %s16, 0
    %18 = vsyncpa [#allocation4], 0
    %s19 = scalar_lea.sflag [#allocation4], 1
    %20 = vsyncpa %s19, 0
    %21 = vsyncpa [#allocation9], 0
    %s22 = scalar_lea.sflag [#allocation9], 1
    %23 = vsyncpa %s22, 0
    loop: start=0, step=1, limit=6
    $region2: #{tpu_custom_call.1} parent=1 // loop_pre_header
      _
    $region3: #{tpu_custom_call.1} parent=1 // loop_header
      %s25 = sphi 0, %s29
      %p26 = scmp.ge.s32.totalorder %s25, 6
      %s32 = sphi 0, %s44
      %s33 = sphi 0, %s40
      %s34 = sphi 0, %s32
      %s35 = sphi 0, %s33
      %s36 = sphi 0, %s34
      %s37 = sphi 0, %s35
      %s47 = sphi 0, %s49
      %s50 = sphi 0, %s47
      %s51 = sphi 0, %s50
      %s67 = sphi 0, %s51
      %s73 = sphi 0, %s75
      %s76 = sphi 0, %s73
      %s77 = sphi 0, %s76
      %s93 = sphi 0, %s77
      %s99 = sphi 0, %s101
      %s102 = sphi 0, %s99
      %s103 = sphi 0, %s102
      %s119 = sphi 0, %s103
      %s125 = sphi 0, %s127
      %s128 = sphi 0, %s125
      %s129 = sphi 0, %s128
      %s145 = sphi 0, %s129
      %s153 = sphi 0, %s155
      %s156 = sphi 0, %s153
      %s157 = sphi 0, %s156
      %s173 = sphi 0, %s157
      %s181 = sphi 0, %s183
      %s184 = sphi 0, %s181
      %s185 = sphi 0, %s184
      %s201 = sphi 0, %s185
      %s209 = sphi 0, %s211
      %s212 = sphi 0, %s209
      %s213 = sphi 0, %s212
      %s229 = sphi 0, %s213
    $region4: #{tpu_custom_call.1} parent=1 // loop_header_branch
      %28 = sbr.rel (%p26) target = $region8
    $region5: #{tpu_custom_call.1} parent=1 // loop_body
      %s30 = ssub.s32 %s25, 1
      %s31 = ssub.s32 %s25, 2
      %s38 = sadd.s32 1, %s33
      %p39 = scmp.ge.s32.totalorder %s38, 2
      %s40 = scalar_select %p39, 0, %s38
      %s41 = sadd.s32 1, %s32
      %s42 = scalar_select %p39, %s41, %s32
      %p43 = scmp.ge.s32.totalorder %s42, 2
      %s44 = scalar_select %p43, 0, %s42
      %s45 = ssub.s32 %s32, %s44
      %p46 = scmp.eq.s32.totalorder %s45, 0
      %s48 = sadd.s32 %s47, 1
      %s49 = scalar_select %p46, %s47, %s48
      %p52 = pneg %p46
      %p53 = scmp.eq.s32.totalorder %s25, 3
      %p54 = por %p52, %p53
      %p55 = scmp.ne.s32.totalorder %s47, %s50
      %p56 = scmp.eq.s32.totalorder %s25, 0
      %p57 = por %p55, %p56
      %p58 = scmp.ne.s32.totalorder %s47, %s50
      %p59 = scmp.eq.s32.totalorder %s30, 3
      %p60 = por %p58, %p59
      %p61 = scmp.ne.s32.totalorder %s50, %s51
      %p62 = scmp.eq.s32.totalorder %s30, 0
      %p63 = por %p61, %p62
      %p64 = scmp.ne.s32.totalorder %s50, %s51
      %p65 = scmp.eq.s32.totalorder %s31, 3
      %p66 = por %p64, %p65
      %p68 = scmp.ne.s32.totalorder %s51, %s67
      %p69 = scmp.eq.s32.totalorder %s31, 0
      %p70 = por %p68, %p69
      %s71 = ssub.s32 %s33, %s40
      %p72 = scmp.eq.s32.totalorder %s71, 0
      %s74 = sadd.s32 %s73, 1
      %s75 = scalar_select %p72, %s73, %s74
      %p78 = pneg %p72
      %p79 = scmp.eq.s32.totalorder %s25, 3
      %p80 = por %p78, %p79
      %p81 = scmp.ne.s32.totalorder %s73, %s76
      %p82 = scmp.eq.s32.totalorder %s25, 0
      %p83 = por %p81, %p82
      %p84 = scmp.ne.s32.totalorder %s73, %s76
      %p85 = scmp.eq.s32.totalorder %s30, 3
      %p86 = por %p84, %p85
      %p87 = scmp.ne.s32.totalorder %s76, %s77
      %p88 = scmp.eq.s32.totalorder %s30, 0
      %p89 = por %p87, %p88
      %p90 = scmp.ne.s32.totalorder %s76, %s77
      %p91 = scmp.eq.s32.totalorder %s31, 3
      %p92 = por %p90, %p91
      %p94 = scmp.ne.s32.totalorder %s77, %s93
      %p95 = scmp.eq.s32.totalorder %s31, 0
      %p96 = por %p94, %p95
      %s97 = ssub.s32 %s33, %s40
      %p98 = scmp.eq.s32.totalorder %s97, 0
      %s100 = sadd.s32 %s99, 1
      %s101 = scalar_select %p98, %s99, %s100
      %p104 = pneg %p98
      %p105 = scmp.eq.s32.totalorder %s25, 3
      %p106 = por %p104, %p105
      %p107 = scmp.ne.s32.totalorder %s99, %s102
      %p108 = scmp.eq.s32.totalorder %s25, 0
      %p109 = por %p107, %p108
      %p110 = scmp.ne.s32.totalorder %s99, %s102
      %p111 = scmp.eq.s32.totalorder %s30, 3
      %p112 = por %p110, %p111
      %p113 = scmp.ne.s32.totalorder %s102, %s103
      %p114 = scmp.eq.s32.totalorder %s30, 0
      %p115 = por %p113, %p114
      %p116 = scmp.ne.s32.totalorder %s102, %s103
      %p117 = scmp.eq.s32.totalorder %s31, 3
      %p118 = por %p116, %p117
      %p120 = scmp.ne.s32.totalorder %s103, %s119
      %p121 = scmp.eq.s32.totalorder %s31, 0
      %p122 = por %p120, %p121
      %s123 = ssub.s32 %s32, %s44
      %p124 = scmp.eq.s32.totalorder %s123, 0
      %s126 = sadd.s32 %s125, 1
      %s127 = scalar_select %p124, %s125, %s126
      %p130 = pneg %p124
      %p131 = scmp.eq.s32.totalorder %s25, 3
      %p132 = por %p130, %p131
      %p133 = scmp.ne.s32.totalorder %s125, %s128
      %p134 = scmp.eq.s32.totalorder %s25, 0
      %p135 = por %p133, %p134
      %p136 = scmp.ne.s32.totalorder %s125, %s128
      %p137 = scmp.eq.s32.totalorder %s30, 3
      %p138 = por %p136, %p137
      %p139 = scmp.ne.s32.totalorder %s128, %s129
      %p140 = scmp.eq.s32.totalorder %s30, 0
      %p141 = por %p139, %p140
      %p142 = scmp.ne.s32.totalorder %s128, %s129
      %p143 = scmp.eq.s32.totalorder %s31, 3
      %p144 = por %p142, %p143
      %p146 = scmp.ne.s32.totalorder %s129, %s145
      %p147 = scmp.eq.s32.totalorder %s31, 0
      %p148 = por %p146, %p147
      %s149 = ssub.s32 %s32, %s44
      %s150 = ssub.s32 %s33, %s40
      %s151 = sor.u32 %s149, %s150
      %p152 = scmp.eq.s32.totalorder %s151, 0
      %s154 = sadd.s32 %s153, 1
      %s155 = scalar_select %p152, %s153, %s154
      %p158 = pneg %p152
      %p159 = scmp.eq.s32.totalorder %s25, 3
      %p160 = por %p158, %p159
      %p161 = scmp.ne.s32.totalorder %s153, %s156
      %p162 = scmp.eq.s32.totalorder %s25, 0
      %p163 = por %p161, %p162
      %p164 = scmp.ne.s32.totalorder %s153, %s156
      %p165 = scmp.eq.s32.totalorder %s30, 3
      %p166 = por %p164, %p165
      %p167 = scmp.ne.s32.totalorder %s156, %s157
      %p168 = scmp.eq.s32.totalorder %s30, 0
      %p169 = por %p167, %p168
      %p170 = scmp.ne.s32.totalorder %s156, %s157
      %p171 = scmp.eq.s32.totalorder %s31, 3
      %p172 = por %p170, %p171
      %p174 = scmp.ne.s32.totalorder %s157, %s173
      %p175 = scmp.eq.s32.totalorder %s31, 0
      %p176 = por %p174, %p175
      %s177 = ssub.s32 %s32, %s44
      %s178 = ssub.s32 %s33, %s40
      %s179 = sor.u32 %s177, %s178
      %p180 = scmp.eq.s32.totalorder %s179, 0
      %s182 = sadd.s32 %s181, 1
      %s183 = scalar_select %p180, %s181, %s182
      %p186 = pneg %p180
      %p187 = scmp.eq.s32.totalorder %s25, 3
      %p188 = por %p186, %p187
      %p189 = scmp.ne.s32.totalorder %s181, %s184
      %p190 = scmp.eq.s32.totalorder %s25, 0
      %p191 = por %p189, %p190
      %p192 = scmp.ne.s32.totalorder %s181, %s184
      %p193 = scmp.eq.s32.totalorder %s30, 3
      %p194 = por %p192, %p193
      %p195 = scmp.ne.s32.totalorder %s184, %s185
      %p196 = scmp.eq.s32.totalorder %s30, 0
      %p197 = por %p195, %p196
      %p198 = scmp.ne.s32.totalorder %s184, %s185
      %p199 = scmp.eq.s32.totalorder %s31, 3
      %p200 = por %p198, %p199
      %p202 = scmp.ne.s32.totalorder %s185, %s201
      %p203 = scmp.eq.s32.totalorder %s31, 0
      %p204 = por %p202, %p203
      %s205 = ssub.s32 %s32, %s44
      %s206 = ssub.s32 %s33, %s40
      %s207 = sor.u32 %s205, %s206
      %p208 = scmp.eq.s32.totalorder %s207, 0
      %s210 = sadd.s32 %s209, 1
      %s211 = scalar_select %p208, %s209, %s210
      %p214 = pneg %p208
      %p215 = scmp.eq.s32.totalorder %s25, 3
      %p216 = por %p214, %p215
      %p217 = scmp.ne.s32.totalorder %s209, %s212
      %p218 = scmp.eq.s32.totalorder %s25, 0
      %p219 = por %p217, %p218
      %p220 = scmp.ne.s32.totalorder %s209, %s212
      %p221 = scmp.eq.s32.totalorder %s30, 3
      %p222 = por %p220, %p221
      %p223 = scmp.ne.s32.totalorder %s212, %s213
      %p224 = scmp.eq.s32.totalorder %s30, 0
      %p225 = por %p223, %p224
      %p226 = scmp.ne.s32.totalorder %s212, %s213
      %p227 = scmp.eq.s32.totalorder %s31, 3
      %p228 = por %p226, %p227
      %p230 = scmp.ne.s32.totalorder %s213, %s229
      %p231 = scmp.eq.s32.totalorder %s31, 0
      %p232 = por %p230, %p231
      %p233 = scmp.le.s32.totalorder 1, %s25
      %p234 = scmp.lt.s32.totalorder %s25, 5
      %p235 = pnand %p233, %p234
      %p236 = pneg %p235
      // Predicated region
      $region9: #{tpu_custom_call.1} parent=5 // pred_check
        _
      $region10: #{tpu_custom_call.1} parent=5 // pred_check_branch
        %238 = sbr.rel (%p235) target = $region12
      $region11: #{tpu_custom_call.1} parent=5 // pred_region
        %s239 = ssub.s32 %s25, 1
      $region12: #{tpu_custom_call.1} parent=5 // pred_fallthru
        _
      %p240 = scmp.lt.s32.totalorder %s25, 4
      // Predicated region
      $region13: #{tpu_custom_call.1} parent=5 // pred_check
        %p241 = pneg %p240
      $region14: #{tpu_custom_call.1} parent=5 // pred_check_branch
        %243 = sbr.rel (%p241) target = $region16
      $region15: #{tpu_custom_call.1} parent=5 // pred_region
        // Predicated region
        $region17: #{tpu_custom_call.1} parent=15 // pred_check
          %p244 = pneg %p57
        $region18: #{tpu_custom_call.1} parent=15 // pred_check_branch
          %246 = sbr.rel (%p244) target = $region20
        $region19: #{tpu_custom_call.1} parent=15 // pred_region
          %s247 = sand.u32 %s47, 1
          %s248 = scalar_lea.sflag [#allocation3], %s247
          %s249 = sand.u32 %s47, 1
          %s250 = smul.addr %s249, 8
          %s251 = scalar_lea.vmem [#allocation2], %s250
          %s253 = ssub.s32 128, 128
          %254 = vsyncadd %s248, %s253
          %s255 = smul.addr %s32, 128
          %s256 = scalar_lea.hbm %s0, %s255
          %s258 = sshll.u32 %s251, 4
          %s259 = int_to_ptr.vmem [resolvable:$true] %s258
          %261 = dma.hbm_to_vmem [thread:$0]  %s256, 128, %s259, %s248
        $region20: #{tpu_custom_call.1} parent=15 // pred_fallthru
          _
        // Predicated region
        $region21: #{tpu_custom_call.1} parent=15 // pred_check
          %p262 = pneg %p83
        $region22: #{tpu_custom_call.1} parent=15 // pred_check_branch
          %264 = sbr.rel (%p262) target = $region24
        $region23: #{tpu_custom_call.1} parent=15 // pred_region
          %s265 = sand.u32 %s73, 1
          %s266 = scalar_lea.sflag [#allocation6], %s265
          %s267 = sand.u32 %s73, 1
          %s268 = smul.addr %s267, 32
          %s269 = scalar_lea.vmem [#allocation5], %s268
          %s271 = ssub.s32 512, 512
          %272 = vsyncadd %s266, %s271
          %s273 = smul.addr %s33, 4
          %s274 = smul.addr %s273, 128
          %s275 = scalar_lea.hbm %s1, %s274
          %s276 = sshll.u32 %s269, 4
          %s277 = int_to_ptr.vmem [resolvable:$true] %s276
          %282 = dma.hbm_to_vmem [thread:$0]  %s275, 512, %s277, %s266, 128, 128, 8
        $region24: #{tpu_custom_call.1} parent=15 // pred_fallthru
          _
        // Predicated region
        $region25: #{tpu_custom_call.1} parent=15 // pred_check
          %p283 = pneg %p109
        $region26: #{tpu_custom_call.1} parent=15 // pred_check_branch
          %285 = sbr.rel (%p283) target = $region28
        $region27: #{tpu_custom_call.1} parent=15 // pred_region
          %p286 = scmp.lt.s32.totalorder %s33, 1
          %s287 = scalar_select %p286, %s33, 1
          %s288 = scalar_lea.vmem %s2, %s287
        $region28: #{tpu_custom_call.1} parent=15 // pred_fallthru
          _
        // Predicated region
        $region29: #{tpu_custom_call.1} parent=15 // pred_check
          %p289 = pneg %p135
        $region30: #{tpu_custom_call.1} parent=15 // pred_check_branch
          %291 = sbr.rel (%p289) target = $region32
        $region31: #{tpu_custom_call.1} parent=15 // pred_region
          %p292 = scmp.lt.s32.totalorder %s32, 1
          %s293 = scalar_select %p292, %s32, 1
          %s294 = scalar_lea.vmem %s3, %s293
        $region32: #{tpu_custom_call.1} parent=15 // pred_fallthru
          _
      $region16: #{tpu_custom_call.1} parent=5 // pred_fallthru
        _
      %p295 = scmp.le.s32.totalorder 1, %s25
      %p296 = scmp.lt.s32.totalorder %s25, 5
      %p297 = pnand %p295, %p296
      %p298 = pneg %p297
      // Predicated region
      $region33: #{tpu_custom_call.1} parent=5 // pred_check
        _
      $region34: #{tpu_custom_call.1} parent=5 // pred_check_branch
        %300 = sbr.rel (%p297) target = $region36
      $region35: #{tpu_custom_call.1} parent=5 // pred_region
        %s301 = ssub.s32 %s25, 1
        %s302 = sand.u32 %s50, 1
        %s303 = scalar_lea.sflag [#allocation3], %s302
        %s304 = sand.u32 %s50, 1
        %s305 = smul.addr %s304, 8
        %s306 = scalar_lea.vmem [#allocation2], %s305
        // Predicated region
        $region37: #{tpu_custom_call.1} parent=35 // pred_check
          %p307 = pneg %p63
        $region38: #{tpu_custom_call.1} parent=35 // pred_check_branch
          %309 = sbr.rel (%p307) target = $region40
        $region39: #{tpu_custom_call.1} parent=35 // pred_region
          %310 = dma.done %s303, 128
        $region40: #{tpu_custom_call.1} parent=35 // pred_fallthru
          _
        %s311 = sand.u32 %s76, 1
        %s312 = scalar_lea.sflag [#allocation6], %s311
        %s313 = sand.u32 %s76, 1
        %s314 = smul.addr %s313, 32
        %s315 = scalar_lea.vmem [#allocation5], %s314
        // Predicated region
        $region41: #{tpu_custom_call.1} parent=35 // pred_check
          %p316 = pneg %p89
        $region42: #{tpu_custom_call.1} parent=35 // pred_check_branch
          %318 = sbr.rel (%p316) target = $region44
        $region43: #{tpu_custom_call.1} parent=35 // pred_region
          %319 = dma.done %s312, 512
        $region44: #{tpu_custom_call.1} parent=35 // pred_fallthru
          _
        %s320 = sand.u32 %s50, 1
        %s321 = scalar_lea.sflag [#allocation3], %s320
        %s322 = sand.u32 %s50, 1
        %s323 = smul.addr %s322, 8
        %s324 = scalar_lea.vmem [#allocation2], %s323
        %p325 = pneg %p63
        %p326 = pneg %p60
        %s327 = sand.u32 %s76, 1
        %s328 = scalar_lea.sflag [#allocation6], %s327
        %s329 = sand.u32 %s76, 1
        %s330 = smul.addr %s329, 32
        %s331 = scalar_lea.vmem [#allocation5], %s330
        %p332 = pneg %p89
        %p333 = pneg %p86
        %p334 = scmp.lt.s32.totalorder %s35, 1
        %s335 = scalar_select %p334, %s35, 1
        %s336 = scalar_lea.vmem %s2, %s335
        %p337 = pneg %p115
        %p338 = pneg %p112
        %p339 = scmp.lt.s32.totalorder %s34, 1
        %s340 = scalar_select %p339, %s34, 1
        %s341 = scalar_lea.vmem %s3, %s340
        %p342 = pneg %p141
        %p343 = pneg %p138
        %p344 = pneg %p169
        %p345 = pneg %p166
        %s346 = sand.u32 %s156, 1
        %s347 = scalar_lea.sflag [#allocation4], %s346
        %s348 = sand.u32 %s156, 1
        %s349 = smul.addr %s348, 8
        %s350 = scalar_lea.vmem [#allocation7], %s349
        %p351 = pneg %p197
        %p352 = pneg %p194
        %s353 = sand.u32 %s30, 1
        %s354 = scalar_lea.sflag [#allocation9], %s353
        %s355 = sand.u32 %s184, 1
        %s356 = smul.addr %s355, 8
        %s357 = scalar_lea.vmem [#allocation8], %s356
        %p358 = pneg %p225
        %p359 = pneg %p222
        %s360 = sand.u32 %s30, 1
        %s361 = scalar_lea.sflag [#allocation9], %s360
        %s362 = sand.u32 %s212, 1
        %s363 = smul.addr %s362, 8
        %s364 = scalar_lea.vmem [#allocation10], %s363
        %p365 = scmp.lt.s32.totalorder %s35, 1
        %s366 = scalar_select %p365, %s35, 1
        %s367 = scalar_lea.vmem %s2, %s366
        %p368 = scmp.lt.s32.totalorder %s34, 1
        %s369 = scalar_select %p368, %s34, 1
        %s370 = scalar_lea.vmem %s3, %s369
        %v371 = vld [vmem:[%s306] sm:$0xff]
        %v372 = vld [vmem:[%s315] sm:$0xff]
        %v373 = vld [vmem:[%s315 + $0x8] sm:$0xff]
        %v374 = vld [vmem:[%s315 + $0x10] sm:$0xff]
        %v375 = vld [vmem:[%s315 + $0x18] sm:$0xff]
        %v376 = vld [vmem:[%s367] sm:$0x1]
        %v377 = vld [vmem:[%s370] sm:$0x1]
        %v379 = vlaneseq
        %v380 = vshrl.u32 %v379, 7
        %v381 = vsub.s32 0, %v380
        %v382 = vrot.slane %v376, %v381
        %vm384 = vcmask 261120
        %v386 = vsel %vm384, %v371, 0
        %388 = vmatprep.subr.mxu0 0.0
        %389 = vmatpush1.msra.mxu0 %v372
        %390 = vmatprep.subr.mxu0 0.0
        %391 = vmatpush1.msra.mxu0 %v373
        %392 = vmatprep.subr.mxu0 0.0
        %393 = vmatpush1.msra.mxu0 %v374
        %394 = vmatprep.subr.mxu0 0.0
        %395 = vmatpush1.msra.mxu0 %v375
        %396 = vmatprep.subr.mxu0 0.0
        %397 = vmatpush1.msra.mxu0 0.0
        %398 = vmatprep.subr.mxu0 0.0
        %399 = vmatpush1.msra.mxu0 0.0
        %400 = vmatprep.subr.mxu0 0.0
        %401 = vmatpush1.msra.mxu0 0.0
        %402 = vmatprep.subr.mxu0 0.0
        %403 = vmatpush1.msra.mxu0 0.0
        %404 = vmatprep.subr.mxu0 0.0
        %405 = vmatpush1.msra.mxu0 0.0
        %406 = vmatprep.subr.mxu0 0.0
        %407 = vmatpush1.msra.mxu0 0.0
        %408 = vmatprep.subr.mxu0 0.0
        %409 = vmatpush1.msra.mxu0 0.0
        %410 = vmatprep.subr.mxu0 0.0
        %411 = vmatpush1.msra.mxu0 0.0
        %412 = vmatprep.subr.mxu0 0.0
        %413 = vmatpush1.msra.mxu0 0.0
        %414 = vmatprep.subr.mxu0 0.0
        %415 = vmatpush1.msra.mxu0 0.0
        %416 = vmatprep.subr.mxu0 0.0
        %417 = vmatpush1.msra.mxu0 0.0
        %418 = vmatprep.subr.mxu0 0.0
        %419 = vmatpush1.msra.mxu0 0.0
        %420 = vmatprep.subr.mxu0 0.0
        %421 = vmatpush1.msra.mxu0 0.0
        %422 = vmatprep.subr.mxu0 0.0
        %423 = vmatpush1.msra.mxu0 0.0
        %424 = vmatprep.subr.mxu0 0.0
        %425 = vmatpush1.msra.mxu0 0.0
        %426 = vmatprep.subr.mxu0 0.0
        %427 = vmatpush1.msra.mxu0 0.0
        %428 = vmatprep.subr.mxu0 0.0
        %429 = vmatpush1.msra.mxu0 0.0
        %430 = vmatprep.subr.mxu0 0.0
        %431 = vmatpush1.msra.mxu0 0.0
        %432 = vmatprep.subr.mxu0 0.0
        %433 = vmatpush1.msra.mxu0 0.0
        %434 = vmatprep.subr.mxu0 0.0
        %435 = vmatpush1.msra.mxu0 0.0
        %436 = vmatprep.subr.mxu0 0.0
        %437 = vmatpush1.msra.mxu0 0.0
        %438 = vmatprep.subr.mxu0 0.0
        %439 = vmatpush1.msra.mxu0 0.0
        %440 = vmatprep.subr.mxu0 0.0
        %441 = vmatpush1.msra.mxu0 0.0
        %442 = vmatprep.subr.mxu0 0.0
        %443 = vmatpush1.msra.mxu0 0.0
        %444 = vmatprep.subr.mxu0 0.0
        %445 = vmatpush1.msra.mxu0 0.0
        %446 = vmatprep.subr.mxu0 0.0
        %447 = vmatpush1.msra.mxu0 0.0
        %448 = vmatprep.subr.mxu0 0.0
        %449 = vmatpush1.msra.mxu0 0.0
        %450 = vmatprep.subr.mxu0 0.0
        %451 = vmatpush1.msra.mxu0 0.0
        %452 = vmatprep.mubr.f32.mxu0 0.0
        %453 = vmatmul.mubr.f32.gmra.mrb[0].mxu0 %v386
        %v454 = vpop.f32.mrb[0].mxu0
        %v455 = vadd.f32 %v382, %v454
        %v456 = vpop.f32.mrb[0].mxu0
        %457 = vdwg.mxu0
        %v459 = vlaneseq
        %v460 = vshrl.u32 %v459, 7
        %v461 = vsub.s32 0, %v460
        %v462 = vrot.slane %v377, %v461
        %465 = vrot.lane.b32.xlu0 %v455, 112
        %v466 = vpop.permute.xlu0 %465
        %vm467 = vcmask 130048
        %v468 = vsel %vm467, %v455, 0
        %v470 = vsel %vm467, %v466, 0
        %472 = vmatprep.subr.mxu0 0.0
        %473 = vmatpush1.xpose.msra.mxu0 %v470
        %474 = vmatprep.subr.mxu0 0.0
        %475 = vmatpush1.xpose.msra.mxu0 0.0
        %476 = vmatprep.subr.mxu0 0.0
        %477 = vmatpush1.xpose.msra.mxu0 0.0
        %478 = vmatprep.subr.mxu0 0.0
        %479 = vmatpush1.xpose.msra.mxu0 0.0
        %480 = vmatprep.subr.mxu0 0.0
        %481 = vmatpush1.xpose.msra.mxu0 0.0
        %482 = vmatprep.subr.mxu0 0.0
        %483 = vmatpush1.xpose.msra.mxu0 0.0
        %484 = vmatprep.subr.mxu0 0.0
        %485 = vmatpush1.xpose.msra.mxu0 0.0
        %486 = vmatprep.subr.mxu0 0.0
        %487 = vmatpush1.xpose.msra.mxu0 0.0
        %488 = vmatprep.subr.mxu0 0.0
        %489 = vmatpush1.xpose.msra.mxu0 0.0
        %490 = vmatprep.subr.mxu0 0.0
        %491 = vmatpush1.xpose.msra.mxu0 0.0
        %492 = vmatprep.subr.mxu0 0.0
        %493 = vmatpush1.xpose.msra.mxu0 0.0
        %494 = vmatprep.subr.mxu0 0.0
        %495 = vmatpush1.xpose.msra.mxu0 0.0
        %496 = vmatprep.subr.mxu0 0.0
        %497 = vmatpush1.xpose.msra.mxu0 0.0
        %498 = vmatprep.subr.mxu0 0.0
        %499 = vmatpush1.xpose.msra.mxu0 0.0
        %500 = vmatprep.subr.mxu0 0.0
        %501 = vmatpush1.xpose.msra.mxu0 0.0
        %502 = vmatprep.subr.mxu0 0.0
        %503 = vmatpush1.xpose.msra.mxu0 0.0
        %504 = vmatprep.subr.mxu0 0.0
        %505 = vmatpush1.xpose.msra.mxu0 0.0
        %506 = vmatprep.subr.mxu0 0.0
        %507 = vmatpush1.xpose.msra.mxu0 0.0
        %508 = vmatprep.subr.mxu0 0.0
        %509 = vmatpush1.xpose.msra.mxu0 0.0
        %510 = vmatprep.subr.mxu0 0.0
        %511 = vmatpush1.xpose.msra.mxu0 0.0
        %512 = vmatprep.subr.mxu0 0.0
        %513 = vmatpush1.xpose.msra.mxu0 0.0
        %514 = vmatprep.subr.mxu0 0.0
        %515 = vmatpush1.xpose.msra.mxu0 0.0
        %516 = vmatprep.subr.mxu0 0.0
        %517 = vmatpush1.xpose.msra.mxu0 0.0
        %518 = vmatprep.subr.mxu0 0.0
        %519 = vmatpush1.xpose.msra.mxu0 0.0
        %520 = vmatprep.subr.mxu0 0.0
        %521 = vmatpush1.xpose.msra.mxu0 0.0
        %522 = vmatprep.subr.mxu0 0.0
        %523 = vmatpush1.xpose.msra.mxu0 0.0
        %524 = vmatprep.subr.mxu0 0.0
        %525 = vmatpush1.xpose.msra.mxu0 0.0
        %526 = vmatprep.subr.mxu0 0.0
        %527 = vmatpush1.xpose.msra.mxu0 0.0
        %528 = vmatprep.subr.mxu0 0.0
        %529 = vmatpush1.xpose.msra.mxu0 0.0
        %530 = vmatprep.subr.mxu0 0.0
        %531 = vmatpush1.xpose.msra.mxu0 0.0
        %532 = vmatprep.subr.mxu0 0.0
        %533 = vmatpush1.xpose.msra.mxu0 0.0
        %534 = vmatprep.subr.mxu0 0.0
        %535 = vmatpush1.xpose.msra.mxu0 0.0
        %536 = vmatprep.mubr.f32.mxu0 0.0
        %537 = vmatmul.mubr.f32.gmra.mrb[0].mxu0 %v468
        %v538 = vpop.f32.mrb[0].mxu0
        %v539 = vadd.f32 %v462, %v538
        %v540 = vpop.f32.mrb[0].mxu0
        %541 = vdwg.mxu0
        %vm542 = vcmask 64512
        %v543 = vsel %vm542, %v539, -inf
        %544 = vmax.xlane.f32.xlu0 %v543
        %v545 = vpop.xlane.xlu0 %544
        %v546 = vsub.f32 %v539, %v545
        %v547 = vmul.f32 %v546, 1.442695
        %v548 = vpow.pop %v547
        %v549 = vsel %vm542, %v548, 0.0
        %550 = vadd.xlane.f32.xlu0 %v549
        %v551 = vpop.xlane.xlu0 %550
        %v552 = vrcp.pop %v551
        %553 = vrot.lane.b32.xlu0 %v455, 96
        %v554 = vpop.permute.xlu0 %553
        %v557 = vsel %vm542, %v548, 0
        %559 = vmatprep.subr.mxu0 0.0
        %560 = vmatpush1.msra.mxu0 %v554
        %561 = vmatprep.subr.mxu0 0.0
        %562 = vmatpush1.msra.mxu0 0.0
        %563 = vmatprep.subr.mxu0 0.0
        %564 = vmatpush1.msra.mxu0 0.0
        %565 = vmatprep.subr.mxu0 0.0
        %566 = vmatpush1.msra.mxu0 0.0
        %567 = vmatprep.subr.mxu0 0.0
        %568 = vmatpush1.msra.mxu0 0.0
        %569 = vmatprep.subr.mxu0 0.0
        %570 = vmatpush1.msra.mxu0 0.0
        %571 = vmatprep.subr.mxu0 0.0
        %572 = vmatpush1.msra.mxu0 0.0
        %573 = vmatprep.subr.mxu0 0.0
        %574 = vmatpush1.msra.mxu0 0.0
        %575 = vmatprep.subr.mxu0 0.0
        %576 = vmatpush1.msra.mxu0 0.0
        %577 = vmatprep.subr.mxu0 0.0
        %578 = vmatpush1.msra.mxu0 0.0
        %579 = vmatprep.subr.mxu0 0.0
        %580 = vmatpush1.msra.mxu0 0.0
        %581 = vmatprep.subr.mxu0 0.0
        %582 = vmatpush1.msra.mxu0 0.0
        %583 = vmatprep.subr.mxu0 0.0
        %584 = vmatpush1.msra.mxu0 0.0
        %585 = vmatprep.subr.mxu0 0.0
        %586 = vmatpush1.msra.mxu0 0.0
        %587 = vmatprep.subr.mxu0 0.0
        %588 = vmatpush1.msra.mxu0 0.0
        %589 = vmatprep.subr.mxu0 0.0
        %590 = vmatpush1.msra.mxu0 0.0
        %591 = vmatprep.subr.mxu0 0.0
        %592 = vmatpush1.msra.mxu0 0.0
        %593 = vmatprep.subr.mxu0 0.0
        %594 = vmatpush1.msra.mxu0 0.0
        %595 = vmatprep.subr.mxu0 0.0
        %596 = vmatpush1.msra.mxu0 0.0
        %597 = vmatprep.subr.mxu0 0.0
        %598 = vmatpush1.msra.mxu0 0.0
        %599 = vmatprep.subr.mxu0 0.0
        %600 = vmatpush1.msra.mxu0 0.0
        %601 = vmatprep.subr.mxu0 0.0
        %602 = vmatpush1.msra.mxu0 0.0
        %603 = vmatprep.subr.mxu0 0.0
        %604 = vmatpush1.msra.mxu0 0.0
        %605 = vmatprep.subr.mxu0 0.0
        %606 = vmatpush1.msra.mxu0 0.0
        %607 = vmatprep.subr.mxu0 0.0
        %608 = vmatpush1.msra.mxu0 0.0
        %609 = vmatprep.subr.mxu0 0.0
        %610 = vmatpush1.msra.mxu0 0.0
        %611 = vmatprep.subr.mxu0 0.0
        %612 = vmatpush1.msra.mxu0 0.0
        %613 = vmatprep.subr.mxu0 0.0
        %614 = vmatpush1.msra.mxu0 0.0
        %615 = vmatprep.subr.mxu0 0.0
        %616 = vmatpush1.msra.mxu0 0.0
        %617 = vmatprep.subr.mxu0 0.0
        %618 = vmatpush1.msra.mxu0 0.0
        %619 = vmatprep.subr.mxu0 0.0
        %620 = vmatpush1.msra.mxu0 0.0
        %621 = vmatprep.subr.mxu0 0.0
        %622 = vmatpush1.msra.mxu0 0.0
        %623 = vmatprep.mubr.f32.mxu0 0.0
        %624 = vmatmul.mubr.f32.gmra.mrb[0].mxu0 %v557
        %v625 = vpop.f32.mrb[0].mxu0
        %v626 = vadd.f32 0.0, %v625
        %v627 = vpop.f32.mrb[0].mxu0
        %628 = vdwg.mxu0
        %v629 = vmul.f32 %v626, %v552
        %630 = vst.msk [vmem:[%s350] sm:$0xff] %vm467, %v629
        %632 = vst.msk [vmem:[%s357] sm:$0xff] %vm467, %v466
        %633 = vst.msk [vmem:[%s364] sm:$0xff] %vm467, %v554
        %s634 = sand.u32 %s156, 1
        %s635 = scalar_lea.sflag [#allocation4], %s634
        %s636 = sand.u32 %s156, 1
        %s637 = smul.addr %s636, 8
        %s638 = scalar_lea.vmem [#allocation7], %s637
        %s639 = sand.u32 %s30, 1
        %s640 = scalar_lea.sflag [#allocation9], %s639
        %s641 = sand.u32 %s184, 1
        %s642 = smul.addr %s641, 8
        %s643 = scalar_lea.vmem [#allocation8], %s642
        %s644 = sand.u32 %s30, 1
        %s645 = scalar_lea.sflag [#allocation9], %s644
        %s646 = sand.u32 %s212, 1
        %s647 = smul.addr %s646, 8
        %s648 = scalar_lea.vmem [#allocation10], %s647
        // Predicated region
        $region45: #{tpu_custom_call.1} parent=35 // pred_check
          %p649 = pneg %p166
        $region46: #{tpu_custom_call.1} parent=35 // pred_check_branch
          %651 = sbr.rel (%p649) target = $region48
        $region47: #{tpu_custom_call.1} parent=35 // pred_region
          %s653 = ssub.s32 128, 128
          %654 = vsyncadd %s635, %s653
          %s655 = smul.addr %s34, 2
          %s656 = sadd.s32 %s35, %s655
          %s657 = smul.addr %s656, 128
          %s658 = scalar_lea.hbm %s4, %s657
          %s660 = sshll.u32 %s638, 4
          %s661 = int_to_ptr.vmem [resolvable:$true] %s660
          %663 = dma.vmem_to_hbm [thread:$0]  %s661, 128, %s658, %s635
        $region48: #{tpu_custom_call.1} parent=35 // pred_fallthru
          _
        // Predicated region
        $region49: #{tpu_custom_call.1} parent=35 // pred_check
          %p664 = pneg %p194
        $region50: #{tpu_custom_call.1} parent=35 // pred_check_branch
          %666 = sbr.rel (%p664) target = $region52
        $region51: #{tpu_custom_call.1} parent=35 // pred_region
          %s668 = ssub.s32 128, 128
          %669 = vsyncadd %s640, %s668
          %s670 = smul.addr %s34, 2
          %s671 = sadd.s32 %s35, %s670
          %s672 = smul.addr %s671, 128
          %s673 = scalar_lea.hbm %s5, %s672
          %s675 = sshll.u32 %s643, 4
          %s676 = int_to_ptr.vmem [resolvable:$true] %s675
          %678 = dma.vmem_to_hbm [thread:$0]  %s676, 128, %s673, %s640
        $region52: #{tpu_custom_call.1} parent=35 // pred_fallthru
          _
        // Predicated region
        $region53: #{tpu_custom_call.1} parent=35 // pred_check
          %p679 = pneg %p222
        $region54: #{tpu_custom_call.1} parent=35 // pred_check_branch
          %681 = sbr.rel (%p679) target = $region56
        $region55: #{tpu_custom_call.1} parent=35 // pred_region
          %s683 = ssub.s32 128, 128
          %684 = vsyncadd %s645, %s683
          %s685 = smul.addr %s34, 2
          %s686 = sadd.s32 %s35, %s685
          %s687 = smul.addr %s686, 128
          %s688 = scalar_lea.hbm %s6, %s687
          %s690 = sshll.u32 %s648, 4
          %s691 = int_to_ptr.vmem [resolvable:$true] %s690
          %693 = dma.vmem_to_hbm [thread:$0]  %s691, 128, %s688, %s645
        $region56: #{tpu_custom_call.1} parent=35 // pred_fallthru
          _
      $region36: #{tpu_custom_call.1} parent=5 // pred_fallthru
        _
      %p694 = scmp.le.s32.totalorder 2, %s25
      // Predicated region
      $region57: #{tpu_custom_call.1} parent=5 // pred_check
        %p695 = pneg %p694
      $region58: #{tpu_custom_call.1} parent=5 // pred_check_branch
        %697 = sbr.rel (%p695) target = $region60
      $region59: #{tpu_custom_call.1} parent=5 // pred_region
        %s698 = ssub.s32 %s25, 2
        // Predicated region
        $region61: #{tpu_custom_call.1} parent=59 // pred_check
          %p699 = pneg %p172
        $region62: #{tpu_custom_call.1} parent=59 // pred_check_branch
          %701 = sbr.rel (%p699) target = $region64
        $region63: #{tpu_custom_call.1} parent=59 // pred_region
          %s702 = sand.u32 %s157, 1
          %s703 = scalar_lea.sflag [#allocation4], %s702
          %s704 = sand.u32 %s157, 1
          %s705 = smul.addr %s704, 8
          %s706 = scalar_lea.vmem [#allocation7], %s705
          %707 = dma.done %s703, 128
        $region64: #{tpu_custom_call.1} parent=59 // pred_fallthru
          _
        // Predicated region
        $region65: #{tpu_custom_call.1} parent=59 // pred_check
          %p708 = pneg %p200
        $region66: #{tpu_custom_call.1} parent=59 // pred_check_branch
          %710 = sbr.rel (%p708) target = $region68
        $region67: #{tpu_custom_call.1} parent=59 // pred_region
          %s711 = sand.u32 %s31, 1
          %s712 = scalar_lea.sflag [#allocation9], %s711
          %s713 = sand.u32 %s185, 1
          %s714 = smul.addr %s713, 8
          %s715 = scalar_lea.vmem [#allocation8], %s714
          %716 = dma.done %s712, 128
        $region68: #{tpu_custom_call.1} parent=59 // pred_fallthru
          _
        // Predicated region
        $region69: #{tpu_custom_call.1} parent=59 // pred_check
          %p717 = pneg %p228
        $region70: #{tpu_custom_call.1} parent=59 // pred_check_branch
          %719 = sbr.rel (%p717) target = $region72
        $region71: #{tpu_custom_call.1} parent=59 // pred_region
          %s720 = sand.u32 %s31, 1
          %s721 = scalar_lea.sflag [#allocation9], %s720
          %s722 = sand.u32 %s213, 1
          %s723 = smul.addr %s722, 8
          %s724 = scalar_lea.vmem [#allocation10], %s723
          %725 = dma.done %s721, 128
        $region72: #{tpu_custom_call.1} parent=59 // pred_fallthru
          _
      $region60: #{tpu_custom_call.1} parent=5 // pred_fallthru
        _
    $region6: #{tpu_custom_call.1} parent=1 // loop_footer
      %s29 = sadd.s32 1, %s25
    $region7: #{tpu_custom_call.1} parent=1 // loop_footer_branch
      %24 = sbr.rel target = $region3
    $region8: #{tpu_custom_call.1} parent=1 // loop_exit
      _
    %726 = vsyncpa [#allocation3], 1
    %s727 = scalar_lea.sflag [#allocation3], 1
    %728 = vsyncpa %s727, 1
    %729 = vsyncpa [#allocation6], 1
    %s730 = scalar_lea.sflag [#allocation6], 1
    %731 = vsyncpa %s730, 1
    %732 = vsyncpa [#allocation4], 1
    %s733 = scalar_lea.sflag [#allocation4], 1
    %734 = vsyncpa %s733, 1
    %735 = vsyncpa [#allocation9], 1
    %s736 = scalar_lea.sflag [#allocation9], 1
    %737 = vsyncpa %s736, 1

</llo_original>
